<compile_context>
chip_gen: v6e
topology: v6e:2x2x1
jax: 0.10.0
libtpu: 0.0.40
codegen_flags: <defaults>
</compile_context>

<pallas_src>
import jax
import jax.numpy as jnp
from jax.experimental import pallas as pl
from jax.experimental.pallas import tpu as pltpu

LANE = 128   # lane-dense feature padding for hidden layers
SUB = 16     # sublane multiple (covers bf16 (16,128) and f32 (8,128) tiles)


def _round_up(n, m):
    return ((n + m - 1) // m) * m


def _pad2(a, rows, cols):
    r, c = a.shape
    return jnp.pad(a, ((0, rows - r), (0, cols - c)))


def _mlp_kernel(x_ref,
                w1_ref, b1_ref,
                w2_ref, b2_ref,
                w3_ref, b3_ref,
                w4_ref, b4_ref,
                o_ref):
    cdt = w1_ref.dtype  # compute dtype fed to the MXU (bf16)
    # Cast x in-kernel (cheap VPU work, hides under slack) instead of paying
    # an extra HBM pad/cast pass in the wrapper.
    x = x_ref[...].astype(cdt)
    # Layer 1: Linear(input, 150) + ReLU   (f32 accumulation / activation math)
    h = jnp.dot(x, w1_ref[...], preferred_element_type=jnp.float32)
    h = jnp.maximum(h + b1_ref[...], 0.0)
    # Layer 2: Linear(150, 150) + ReLU
    h = jnp.dot(h.astype(cdt), w2_ref[...], preferred_element_type=jnp.float32)
    h = jnp.maximum(h + b2_ref[...], 0.0)
    # Layer 3: Linear(150, 50) + ReLU
    h = jnp.dot(h.astype(cdt), w3_ref[...], preferred_element_type=jnp.float32)
    h = jnp.maximum(h + b3_ref[...], 0.0)
    # Output layer: Linear(50, output), no activation.  Output width is the
    # real d_out (unpadded); the masked store cost is negligible vs the HBM
    # bytes saved by not writing a 128-wide padded f32 block.
    h = jnp.dot(h.astype(cdt), w4_ref[...], preferred_element_type=jnp.float32)
    o_ref[...] = (h + b4_ref[...]).astype(o_ref.dtype)


def prepare_params(params, compute_dtype=jnp.bfloat16):
    """Pad hidden dims to multiples of 128 and cast weights to the MXU dtype.

    Call ONCE and reuse: hoists ~8 small pad/cast XLA ops out of the per-call
    path.  w4/b4 keep their real output width (the kernel writes an unpadded
    output block); all padding is zeros so results are exact.
    """
    d_in = params["w1"].shape[0]
    h1 = params["w1"].shape[1]
    h2 = params["w2"].shape[1]
    h3 = params["w3"].shape[1]
    d_out = params["w4"].shape[1]
    h1_p, h2_p, h3_p = (_round_up(h, LANE) for h in (h1, h2, h3))
    return {
        "w1": _pad2(params["w1"], d_in, h1_p).astype(compute_dtype),
        "b1": _pad2(params["b1"], 1, h1_p).astype(jnp.float32),
        "w2": _pad2(params["w2"], h1_p, h2_p).astype(compute_dtype),
        "b2": _pad2(params["b2"], 1, h2_p).astype(jnp.float32),
        "w3": _pad2(params["w3"], h2_p, h3_p).astype(compute_dtype),
        "b3": _pad2(params["b3"], 1, h3_p).astype(jnp.float32),
        "w4": _pad2(params["w4"], h3_p, d_out).astype(compute_dtype),
        "b4": params["b4"].astype(jnp.float32),
    }


def mlp_forward(x, prepped, *, batch_tile=None):
    """Run the fused MLP kernel.

    x: (B, input_net) float32
    prepped: output of prepare_params(params).
    batch_tile: rows per grid step (rounded to a multiple of 16).  Default:
      single tile for small batches; for large batches up to 2048 rows
      (multiple of 256) with >=2 grid steps so megacore has work on both TCs.
    """
    B, d_in = x.shape
    assert prepped["w1"].shape[0] == d_in, "input feature size mismatch"
    d_out = prepped["w4"].shape[1]

    if batch_tile is None:
        if B <= 1024:
            batch_tile = _round_up(B, SUB)          # single tile
        else:
            # Big tiles amortize the ~0.35 us per-grid-step overhead; cap at
            # 2048 (v7x has half the VMEM of v5e/v6e) and keep >=2 steps so
            # the "parallel" batch axis can engage both TensorCores.
            batch_tile = min(2048, _round_up(pl.cdiv(B, 2), 256))
    else:
        batch_tile = max(SUB, _round_up(int(batch_tile), SUB))

    B_p = _round_up(B, batch_tile)
    grid = (B_p // batch_tile,)

    # Only pad the batch axis (zero rows); x stays f32 at its real feature
    # width -- no wrapper-side feature padding / dtype cast pass over HBM.
    x_p = x.astype(jnp.float32)
    if B_p != B:
        x_p = jnp.pad(x_p, ((0, B_p - B), (0, 0)))

    weight_args = (prepped["w1"], prepped["b1"],
                   prepped["w2"], prepped["b2"],
                   prepped["w3"], prepped["b3"],
                   prepped["w4"], prepped["b4"])

    # Weights/biases: constant block index -> VMEM-resident across grid steps.
    def resident(a):
        return pl.BlockSpec(a.shape, lambda i: (0, 0))

    in_specs = [pl.BlockSpec((batch_tile, d_in), lambda i: (i, 0))]
    in_specs += [resident(a) for a in weight_args]
    # Unpadded output block: (batch_tile, d_out).  Last dim == full array dim
    # is legal; HBM side stays one contiguous linear transfer per tile.
    out_spec = pl.BlockSpec((batch_tile, d_out), lambda i: (i, 0))

    # Advisory cost estimate (padded dims; close enough for scheduling).
    flops = 2 * B_p * sum(prepped[f"w{k}"].shape[0] * prepped[f"w{k}"].shape[1]
                          for k in range(1, 5))
    bytes_accessed = (B_p * d_in * 4                 # x read (f32)
                      + B_p * d_out * 4              # out write (f32)
                      + sum(int(a.size) * a.dtype.itemsize for a in weight_args))

    f = pl.pallas_call(
        _mlp_kernel,
        out_shape=jax.ShapeDtypeStruct((B_p, d_out), jnp.float32),
        grid_spec=pltpu.PrefetchScalarGridSpec(
            num_scalar_prefetch=0,
            grid=grid,
            in_specs=in_specs,
            out_specs=out_spec,
        ),
        compiler_params=pltpu.CompilerParams(
            dimension_semantics=("parallel",),
            # Big tiles on v5e (16 MiB scoped default) need an explicit raise;
            # 32 MiB is also safe on v7x (64 MiB physical per TC).
            vmem_limit_bytes=32 * 1024 * 1024,
        ),
        cost_estimate=pl.CostEstimate(flops=flops, transcendentals=0,
                                      bytes_accessed=bytes_accessed),
    )
    out_p = f(x_p, *weight_args)
    return out_p[:B] if B_p != B else out_p


def init_params(key, input_net, output_net):
    """Deterministic init mimicking PyTorch nn.Linear default U[-1/sqrt(fan_in), 1/sqrt(fan_in)].

    Weights stored transposed relative to PyTorch: (in_features, out_features).
    Biases stored as (1, out_features).
    """
    dims = [(input_net, 150), (150, 150), (150, 50), (50, output_net)]
    params = {}
    keys = jax.random.split(key, 2 * len(dims))
    for i, (fan_in, fan_out) in enumerate(dims):
        bound = 1.0 / jnp.sqrt(jnp.float32(fan_in))
        w = jax.random.uniform(keys[2 * i], (fan_in, fan_out),
                               minval=-bound, maxval=bound, dtype=jnp.float32)
        b = jax.random.uniform(keys[2 * i + 1], (1, fan_out),
                               minval=-bound, maxval=bound, dtype=jnp.float32)
        params[f"w{i + 1}"] = w
        params[f"b{i + 1}"] = b
    return params


def mlp_reference(x, params):
    """Pure-JAX f32 reference (matches the PyTorch module)."""
    h = jnp.maximum(x @ params["w1"] + params["b1"], 0.0)
    h = jnp.maximum(h @ params["w2"] + params["b2"], 0.0)
    h = jnp.maximum(h @ params["w3"] + params["b3"], 0.0)
    return h @ params["w4"] + params["b4"]


if __name__ == "__main__":
    key = jax.random.PRNGKey(0)
    k_param, k_x = jax.random.split(key)

    input_net = 32   # small synthetic input feature size
    output_net = 10  # small synthetic number of classes
    batch = 8

    params = init_params(k_param, input_net, output_net)
    prepped = prepare_params(params)   # pad + bf16-cast weights ONCE
    x = jax.random.normal(k_x, (batch, input_net), dtype=jnp.float32)

    # Single-tile path.
    out = jax.block_until_ready(mlp_forward(x, prepped))
    ref = mlp_reference(x, params)
    assert out.shape == (batch, output_net)
    # bf16 MXU inputs with f32 accumulation -> loose tolerance vs f32 reference.
    assert jnp.allclose(out, ref, atol=5e-2, rtol=5e-2), "mismatch vs reference (single tile)"

    # Multi-step grid + batch-padding path (batch not a multiple of the tile).
    batch2 = 20
    x2 = jax.random.normal(jax.random.PRNGKey(1), (batch2, input_net), dtype=jnp.float32)
    out2 = jax.block_until_ready(mlp_forward(x2, prepped, batch_tile=16))
    ref2 = mlp_reference(x2, params)
    assert out2.shape == (batch2, output_net)
    assert jnp.allclose(out2, ref2, atol=5e-2, rtol=5e-2), "mismatch vs reference (tiled)"

    print("KERNEL_OK")
</pallas_src>

<mosaic_0001>
module attributes {stable_mosaic.version = 11 : i64} {
  func.func @_mlp_kernel(%arg0: i32, %arg1: memref<16x32xf32, #tpu.memory_space<vmem>>, %arg2: memref<32x256xbf16, #tpu.memory_space<vmem>>, %arg3: memref<1x256xf32, #tpu.memory_space<vmem>>, %arg4: memref<256x256xbf16, #tpu.memory_space<vmem>>, %arg5: memref<1x256xf32, #tpu.memory_space<vmem>>, %arg6: memref<256x128xbf16, #tpu.memory_space<vmem>>, %arg7: memref<1x128xf32, #tpu.memory_space<vmem>>, %arg8: memref<128x10xbf16, #tpu.memory_space<vmem>>, %arg9: memref<1x10xf32, #tpu.memory_space<vmem>>, %arg10: memref<16x10xf32, #tpu.memory_space<vmem>>) attributes {dimension_semantics = [#tpu.dimension_semantics<parallel>], iteration_bounds = array<i64: 1>, scalar_prefetch = 0 : i64, scratch_operands = 0 : i64, tpu.core_type = #tpu.core_type<tc>, window_params = [{transform_indices = @transform_0, window_bounds = array<i64: 16, 32>}, {pipeline_mode = #tpu.pipeline_mode<synchronous>, transform_indices = @transform_1, window_bounds = array<i64: 32, 256>}, {pipeline_mode = #tpu.pipeline_mode<synchronous>, transform_indices = @transform_2, window_bounds = array<i64: 1, 256>}, {pipeline_mode = #tpu.pipeline_mode<synchronous>, transform_indices = @transform_3, window_bounds = array<i64: 256, 256>}, {pipeline_mode = #tpu.pipeline_mode<synchronous>, transform_indices = @transform_4, window_bounds = array<i64: 1, 256>}, {pipeline_mode = #tpu.pipeline_mode<synchronous>, transform_indices = @transform_5, window_bounds = array<i64: 256, 128>}, {pipeline_mode = #tpu.pipeline_mode<synchronous>, transform_indices = @transform_6, window_bounds = array<i64: 1, 128>}, {pipeline_mode = #tpu.pipeline_mode<synchronous>, transform_indices = @transform_7, window_bounds = array<i64: 128, 10>}, {pipeline_mode = #tpu.pipeline_mode<synchronous>, transform_indices = @transform_8, window_bounds = array<i64: 1, 10>}, {transform_indices = @transform_9, window_bounds = array<i64: 16, 10>}]} {
    %c0 = arith.constant 0 : index
    %c0_0 = arith.constant 0 : index
    %0 = vector.load %arg1[%c0, %c0_0] : memref<16x32xf32, #tpu.memory_space<vmem>>, vector<16x32xf32>
    %1 = arith.truncf %0 : vector<16x32xf32> to vector<16x32xbf16>
    %c0_1 = arith.constant 0 : index
    %c0_2 = arith.constant 0 : index
    %2 = vector.load %arg2[%c0_1, %c0_2] : memref<32x256xbf16, #tpu.memory_space<vmem>>, vector<32x256xbf16>
    %cst = arith.constant dense<0.000000e+00> : vector<16x256xf32>
    %3 = tpu.matmul %1, %2, %cst {dimension_numbers = #tpu.dot_dimension_numbers<[1], [0], [0], [1], [0, 0, 1, 1], [], []>} : vector<16x32xbf16>, vector<32x256xbf16>, vector<16x256xf32> -> vector<16x256xf32>
    %c0_3 = arith.constant 0 : index
    %c0_4 = arith.constant 0 : index
    %4 = vector.load %arg3[%c0_3, %c0_4] : memref<1x256xf32, #tpu.memory_space<vmem>>, vector<1x256xf32>
    %5 = vector.broadcast %4 : vector<1x256xf32> to vector<16x256xf32>
    %6 = arith.addf %3, %5 : vector<16x256xf32>
    %cst_5 = arith.constant 0.000000e+00 : f32
    %7 = vector.broadcast %cst_5 : f32 to vector<16x256xf32>
    %8 = arith.maximumf %6, %7 : vector<16x256xf32>
    %9 = arith.truncf %8 : vector<16x256xf32> to vector<16x256xbf16>
    %c0_6 = arith.constant 0 : index
    %c0_7 = arith.constant 0 : index
    %10 = vector.load %arg4[%c0_6, %c0_7] : memref<256x256xbf16, #tpu.memory_space<vmem>>, vector<256x256xbf16>
    %cst_8 = arith.constant dense<0.000000e+00> : vector<16x256xf32>
    %11 = tpu.matmul %9, %10, %cst_8 {dimension_numbers = #tpu.dot_dimension_numbers<[1], [0], [0], [1], [0, 0, 1, 1], [], []>} : vector<16x256xbf16>, vector<256x256xbf16>, vector<16x256xf32> -> vector<16x256xf32>
    %c0_9 = arith.constant 0 : index
    %c0_10 = arith.constant 0 : index
    %12 = vector.load %arg5[%c0_9, %c0_10] : memref<1x256xf32, #tpu.memory_space<vmem>>, vector<1x256xf32>
    %13 = vector.broadcast %12 : vector<1x256xf32> to vector<16x256xf32>
    %14 = arith.addf %11, %13 : vector<16x256xf32>
    %cst_11 = arith.constant 0.000000e+00 : f32
    %15 = vector.broadcast %cst_11 : f32 to vector<16x256xf32>
    %16 = arith.maximumf %14, %15 : vector<16x256xf32>
    %17 = arith.truncf %16 : vector<16x256xf32> to vector<16x256xbf16>
    %c0_12 = arith.constant 0 : index
    %c0_13 = arith.constant 0 : index
    %18 = vector.load %arg6[%c0_12, %c0_13] : memref<256x128xbf16, #tpu.memory_space<vmem>>, vector<256x128xbf16>
    %cst_14 = arith.constant dense<0.000000e+00> : vector<16x128xf32>
    %19 = tpu.matmul %17, %18, %cst_14 {dimension_numbers = #tpu.dot_dimension_numbers<[1], [0], [0], [1], [0, 0, 1, 1], [], []>} : vector<16x256xbf16>, vector<256x128xbf16>, vector<16x128xf32> -> vector<16x128xf32>
    %c0_15 = arith.constant 0 : index
    %c0_16 = arith.constant 0 : index
    %20 = vector.load %arg7[%c0_15, %c0_16] : memref<1x128xf32, #tpu.memory_space<vmem>>, vector<1x128xf32>
    %21 = vector.broadcast %20 : vector<1x128xf32> to vector<16x128xf32>
    %22 = arith.addf %19, %21 : vector<16x128xf32>
    %cst_17 = arith.constant 0.000000e+00 : f32
    %23 = vector.broadcast %cst_17 : f32 to vector<16x128xf32>
    %24 = arith.maximumf %22, %23 : vector<16x128xf32>
    %25 = arith.truncf %24 : vector<16x128xf32> to vector<16x128xbf16>
    %c0_18 = arith.constant 0 : index
    %c0_19 = arith.constant 0 : index
    %26 = vector.load %arg8[%c0_18, %c0_19] : memref<128x10xbf16, #tpu.memory_space<vmem>>, vector<128x10xbf16>
    %cst_20 = arith.constant dense<0.000000e+00> : vector<16x10xf32>
    %27 = tpu.matmul %25, %26, %cst_20 {dimension_numbers = #tpu.dot_dimension_numbers<[1], [0], [0], [1], [0, 0, 1, 1], [], []>} : vector<16x128xbf16>, vector<128x10xbf16>, vector<16x10xf32> -> vector<16x10xf32>
    %c0_21 = arith.constant 0 : index
    %c0_22 = arith.constant 0 : index
    %28 = vector.load %arg9[%c0_21, %c0_22] : memref<1x10xf32, #tpu.memory_space<vmem>>, vector<1x10xf32>
    %29 = vector.broadcast %28 : vector<1x10xf32> to vector<16x10xf32>
    %30 = arith.addf %27, %29 : vector<16x10xf32>
    %c0_23 = arith.constant 0 : index
    %c0_24 = arith.constant 0 : index
    %31 = vector.load %arg10[%c0_23, %c0_24] : memref<16x10xf32, #tpu.memory_space<vmem>>, vector<16x10xf32>
    tpu.vector_store %arg10[%c0_23, %c0_24], %30 {strides = array<i32>} : memref<16x10xf32, #tpu.memory_space<vmem>>, vector<16x10xf32>,
    return
  }
  func.func @transform_0(%arg0: i32) -> (i32, i32) {
    %c0_i32 = arith.constant 0 : i32
    %c0_i32_0 = arith.constant 0 : i32
    return %arg0, %c0_i32 : i32, i32
  }
  func.func @transform_1(%arg0: i32) -> (i32, i32) {
    %c0_i32 = arith.constant 0 : i32
    %c0_i32_0 = arith.constant 0 : i32
    %c0_i32_1 = arith.constant 0 : i32
    return %c0_i32, %c0_i32_0 : i32, i32
  }
  func.func @transform_2(%arg0: i32) -> (i32, i32) {
    %c0_i32 = arith.constant 0 : i32
    %c0_i32_0 = arith.constant 0 : i32
    %c0_i32_1 = arith.constant 0 : i32
    return %c0_i32, %c0_i32_0 : i32, i32
  }
  func.func @transform_3(%arg0: i32) -> (i32, i32) {
    %c0_i32 = arith.constant 0 : i32
    %c0_i32_0 = arith.constant 0 : i32
    %c0_i32_1 = arith.constant 0 : i32
    return %c0_i32, %c0_i32_0 : i32, i32
  }
  func.func @transform_4(%arg0: i32) -> (i32, i32) {
    %c0_i32 = arith.constant 0 : i32
    %c0_i32_0 = arith.constant 0 : i32
    %c0_i32_1 = arith.constant 0 : i32
    return %c0_i32, %c0_i32_0 : i32, i32
  }
  func.func @transform_5(%arg0: i32) -> (i32, i32) {
    %c0_i32 = arith.constant 0 : i32
    %c0_i32_0 = arith.constant 0 : i32
    %c0_i32_1 = arith.constant 0 : i32
    return %c0_i32, %c0_i32_0 : i32, i32
  }
  func.func @transform_6(%arg0: i32) -> (i32, i32) {
    %c0_i32 = arith.constant 0 : i32
    %c0_i32_0 = arith.constant 0 : i32
    %c0_i32_1 = arith.constant 0 : i32
    return %c0_i32, %c0_i32_0 : i32, i32
  }
  func.func @transform_7(%arg0: i32) -> (i32, i32) {
    %c0_i32 = arith.constant 0 : i32
    %c0_i32_0 = arith.constant 0 : i32
    %c0_i32_1 = arith.constant 0 : i32
    return %c0_i32, %c0_i32_0 : i32, i32
  }
  func.func @transform_8(%arg0: i32) -> (i32, i32) {
    %c0_i32 = arith.constant 0 : i32
    %c0_i32_0 = arith.constant 0 : i32
    %c0_i32_1 = arith.constant 0 : i32
    return %c0_i32, %c0_i32_0 : i32, i32
  }
  func.func @transform_9(%arg0: i32) -> (i32, i32) {
    %c0_i32 = arith.constant 0 : i32
    %c0_i32_0 = arith.constant 0 : i32
    return %arg0, %c0_i32 : i32, i32
  }
}

</mosaic_0001>

<llo_original>
// kernel: tpu_custom_call.1
$region0: #{tpu_custom_call.1}
  #allocation0 [shape = 'u32[]', space=smem, size = 0x4, offset = 0x4, fixed_abs, tag = 'smem constant byte address 0x4 - core index']
  #allocation1 [shape = 'u32[144,128]{1,0:T(1,128)}', space=vmem, size = 0x12000, scoped, tag = 'internal scratch']
  %s0 = inlined_call_operand.vmem [shape: f32[16,32], index: 0, kind: input, shape index: {}]
  %s1 = inlined_call_operand.vmem [shape: bf16[32,256], index: 1, kind: input, shape index: {}]
  %s2 = inlined_call_operand.vmem [shape: f32[1,256], index: 2, kind: input, shape index: {}]
  %s3 = inlined_call_operand.hbm [shape: bf16[256,256], index: 3, kind: input, shape index: {}]
  %s4 = inlined_call_operand.vmem [shape: f32[1,256], index: 4, kind: input, shape index: {}]
  %s5 = inlined_call_operand.hbm [shape: bf16[256,128], index: 5, kind: input, shape index: {}]
  %s6 = inlined_call_operand.vmem [shape: f32[1,128], index: 6, kind: input, shape index: {}]
  %s7 = inlined_call_operand.vmem [shape: bf16[128,10], index: 7, kind: input, shape index: {}]
  %s8 = inlined_call_operand.vmem [shape: f32[1,10], index: 8, kind: input, shape index: {}]
  %s9 = inlined_call_operand.hbm [shape: f32[16,10], index: 9, kind: output, shape index: {}]
  %s10 = sld [smem:[#allocation0]]
  $region54: #{tpu_custom_call.1} parent=0
    _
  %s12 = ssub.s32 1, %s10
  %s13 = scalar_select 0, %s12, %s10
  $region1: #{tpu_custom_call.1} parent=0
    #allocation2 [shape = 'u8[131072]{0}', space=vmem, size = 0x20000, scoped, tag = 'input window, operand 3, single buffered']
    #allocation3 [shape = 's32[1]{0}', space=sflag, size = 0x4, scoped, tag = 'scoped memory for tpu_custom_call.1']
    #allocation4 [shape = 's32[1]{0}', space=sflag, size = 0x4, scoped, tag = 'scoped memory for tpu_custom_call.1']
    #allocation5 [shape = 'u8[65536]{0}', space=vmem, size = 0x10000, scoped, tag = 'input window, operand 5, single buffered']
    #allocation6 [shape = 's32[1]{0}', space=sflag, size = 0x4, scoped, tag = 'scoped memory for tpu_custom_call.1']
    #allocation7 [shape = 'u8[8192]{0}', space=vmem, size = 0x2000, scoped, tag = 'output window, operand 0, single buffered']
    %14 = vsyncpa [#allocation3], 0
    %15 = vsyncpa [#allocation6], 0
    %16 = vsyncpa [#allocation4], 0
    // Predicated region
    $region2: #{tpu_custom_call.1} parent=1 // pred_check
      _
    $region3: #{tpu_custom_call.1} parent=1 // pred_check_branch
      %18 = sbr.rel (0) target = $region5
    $region4: #{tpu_custom_call.1} parent=1 // pred_region
      _
    $region5: #{tpu_custom_call.1} parent=1 // pred_fallthru
      _
    // Predicated region
    $region6: #{tpu_custom_call.1} parent=1 // pred_check
      _
    $region7: #{tpu_custom_call.1} parent=1 // pred_check_branch
      %20 = sbr.rel (0) target = $region9
    $region8: #{tpu_custom_call.1} parent=1 // pred_region
      _
    $region9: #{tpu_custom_call.1} parent=1 // pred_fallthru
      _
    // Predicated region
    $region10: #{tpu_custom_call.1} parent=1 // pred_check
      _
    $region11: #{tpu_custom_call.1} parent=1 // pred_check_branch
      %22 = sbr.rel (0) target = $region13
    $region12: #{tpu_custom_call.1} parent=1 // pred_region
      _
    $region13: #{tpu_custom_call.1} parent=1 // pred_fallthru
      _
    // Predicated region
    $region14: #{tpu_custom_call.1} parent=1 // pred_check
      _
    $region15: #{tpu_custom_call.1} parent=1 // pred_check_branch
      %24 = sbr.rel (0) target = $region17
    $region16: #{tpu_custom_call.1} parent=1 // pred_region
      %s26 = ssub.s32 4096, 4096
      %27 = vsyncadd [#allocation3], %s26
      %s28 = sshll.u32 [#allocation2], 4
      %s29 = int_to_ptr.vmem [resolvable:$true] %s28
      %34 = dma.hbm_to_vmem [thread:$0]  %s3, 4096, %s29, [#allocation3], 128, 128, 8
    $region17: #{tpu_custom_call.1} parent=1 // pred_fallthru
      _
    // Predicated region
    $region18: #{tpu_custom_call.1} parent=1 // pred_check
      _
    $region19: #{tpu_custom_call.1} parent=1 // pred_check_branch
      %36 = sbr.rel (0) target = $region21
    $region20: #{tpu_custom_call.1} parent=1 // pred_region
      _
    $region21: #{tpu_custom_call.1} parent=1 // pred_fallthru
      _
    // Predicated region
    $region22: #{tpu_custom_call.1} parent=1 // pred_check
      _
    $region23: #{tpu_custom_call.1} parent=1 // pred_check_branch
      %38 = sbr.rel (0) target = $region25
    $region24: #{tpu_custom_call.1} parent=1 // pred_region
      %s40 = ssub.s32 2048, 2048
      %41 = vsyncadd [#allocation6], %s40
      %s42 = sshll.u32 [#allocation5], 4
      %s43 = int_to_ptr.vmem [resolvable:$true] %s42
      %48 = dma.hbm_to_vmem [thread:$0]  %s5, 2048, %s43, [#allocation6], 64, 64, 4
    $region25: #{tpu_custom_call.1} parent=1 // pred_fallthru
      _
    // Predicated region
    $region26: #{tpu_custom_call.1} parent=1 // pred_check
      _
    $region27: #{tpu_custom_call.1} parent=1 // pred_check_branch
      %50 = sbr.rel (0) target = $region29
    $region28: #{tpu_custom_call.1} parent=1 // pred_region
      _
    $region29: #{tpu_custom_call.1} parent=1 // pred_fallthru
      _
    // Predicated region
    $region30: #{tpu_custom_call.1} parent=1 // pred_check
      _
    $region31: #{tpu_custom_call.1} parent=1 // pred_check_branch
      %52 = sbr.rel (0) target = $region33
    $region32: #{tpu_custom_call.1} parent=1 // pred_region
      _
    $region33: #{tpu_custom_call.1} parent=1 // pred_fallthru
      _
    // Predicated region
    $region34: #{tpu_custom_call.1} parent=1 // pred_check
      _
    $region35: #{tpu_custom_call.1} parent=1 // pred_check_branch
      %54 = sbr.rel (0) target = $region37
    $region36: #{tpu_custom_call.1} parent=1 // pred_region
      _
    $region37: #{tpu_custom_call.1} parent=1 // pred_fallthru
      _
    // Predicated region
    $region38: #{tpu_custom_call.1} parent=1 // pred_check
      _
    $region39: #{tpu_custom_call.1} parent=1 // pred_check_branch
      %56 = sbr.rel (0) target = $region41
    $region40: #{tpu_custom_call.1} parent=1 // pred_region
      %57 = dma.done [#allocation3], 4096
    $region41: #{tpu_custom_call.1} parent=1 // pred_fallthru
      _
    // Predicated region
    $region42: #{tpu_custom_call.1} parent=1 // pred_check
      _
    $region43: #{tpu_custom_call.1} parent=1 // pred_check_branch
      %59 = sbr.rel (0) target = $region45
    $region44: #{tpu_custom_call.1} parent=1 // pred_region
      %60 = dma.done [#allocation6], 2048
    $region45: #{tpu_custom_call.1} parent=1 // pred_fallthru
      _
    %v62 = vld [vmem:[%s0] sm:$0xff]
    %v63 = vld [vmem:[%s0 + $0x8] sm:$0xff]
    %v64 = vpack.c.bf16 %v63, %v62
    %v65 = vld [vmem:[%s1] sm:$0xff]
    %v66 = vld [vmem:[%s1 + $0x8] sm:$0xff]
    %v67 = vld [vmem:[%s1 + $0x10] sm:$0xff]
    %v68 = vld [vmem:[%s1 + $0x18] sm:$0xff]
    %v69 = vld [vmem:[%s2] sm:$0x3]
    %v71 = vlaneseq
    %v72 = vshrl.u32 %v71, 7
    %v73 = vsub.s32 0, %v72
    %v74 = vrot.slane %v69, %v73
    %v75 = vlaneseq
    %v76 = vshrl.u32 %v75, 7
    %v77 = vsub.s32 1, %v76
    %v78 = vrot.slane %v69, %v77
    %v85 = vunpack.c.l.b16 %v65
    %v86 = vunpack.c.h.b16 %v65
    %v87 = vunpack.c.l.b16 %v66
    %v88 = vunpack.c.h.b16 %v66
    %v89 = vunpack.c.l.b16 %v67
    %v90 = vunpack.c.h.b16 %v67
    %v91 = vunpack.c.l.b16 %v68
    %v92 = vunpack.c.h.b16 %v68
    %v93 = vpack.c.b16 %v87, %v85
    %v94 = vpack.c.b16 %v88, %v86
    %v95 = vpack.c.b16 %v91, %v89
    %v96 = vpack.c.b16 %v92, %v90
    %vm101 = vcmask 261120
    %v103 = vsel %vm101, %v64, 0
    %105 = vmatprep.subr.bf16.mxu0 0
    %106 = vmatpush1.bf16.msra.mxu0 0
    %107 = vmatprep.subr.bf16.mxu0 0
    %108 = vmatpush1.bf16.msra.mxu0 0
    %109 = vmatprep.subr.bf16.mxu0 0
    %110 = vmatpush1.bf16.msra.mxu0 0
    %111 = vmatprep.subr.bf16.mxu0 0
    %112 = vmatpush1.bf16.msra.mxu0 0
    %113 = vmatprep.subr.bf16.mxu0 0
    %114 = vmatpush1.bf16.msra.mxu0 0
    %115 = vmatprep.subr.bf16.mxu0 0
    %116 = vmatpush1.bf16.msra.mxu0 0
    %117 = vmatprep.subr.bf16.mxu0 %v96
    %118 = vmatpush1.bf16.msra.mxu0 %v95
    %119 = vmatprep.subr.bf16.mxu0 %v94
    %120 = vmatpush1.bf16.msra.mxu0 %v93
    %121 = vmatprep.subr.bf16.mxu0 0
    %122 = vmatpush2.bf16.msra.mxu0 0
    %123 = vmatprep.subr.bf16.mxu0 0
    %124 = vmatpush2.bf16.msra.mxu0 0
    %125 = vmatprep.subr.bf16.mxu0 0
    %126 = vmatpush2.bf16.msra.mxu0 0
    %127 = vmatprep.subr.bf16.mxu0 0
    %128 = vmatpush2.bf16.msra.mxu0 0
    %129 = vmatprep.subr.bf16.mxu0 0
    %130 = vmatpush2.bf16.msra.mxu0 0
    %131 = vmatprep.subr.bf16.mxu0 0
    %132 = vmatpush2.bf16.msra.mxu0 0
    %133 = vmatprep.subr.bf16.mxu0 0
    %134 = vmatpush2.bf16.msra.mxu0 0
    %135 = vmatprep.subr.bf16.mxu0 0
    %136 = vmatpush2.bf16.msra.mxu0 0
    %137 = vmatprep.mubr.bf16.mxu0 0
    %138 = vmatmul.mubr.bf16.gmra.mxu0 %v103
    %v139 = vpop.f32.mrf.mxu0
    %v140 = vadd.f32 %v74, %v139
    %v141 = vpop.f32.mrf.mxu0
    %v142 = vadd.f32 %v78, %v141
    %v143 = vpop.f32.mrf.mxu0
    %v144 = vadd.f32 %v74, %v143
    %v145 = vpop.f32.mrf.mxu0
    %v146 = vadd.f32 %v78, %v145
    %147 = vdwg.mxu0
    %v148 = vmax.f32 %v140, 0.0
    %v149 = vmax.f32 %v142, 0.0
    %v150 = vmax.f32 %v144, 0.0
    %v151 = vmax.f32 %v146, 0.0
    %v152 = vpack.c.bf16 %v150, %v148
    %v153 = vpack.c.bf16 %v151, %v149
    %v154 = vld [vmem:[#allocation2] sm:$0xff]
    %v155 = vld [vmem:[#allocation2 + $0x8] sm:$0xff]
    %v156 = vld [vmem:[#allocation2 + $0x10] sm:$0xff]
    %v157 = vld [vmem:[#allocation2 + $0x18] sm:$0xff]
    %v158 = vld [vmem:[#allocation2 + $0x20] sm:$0xff]
    %v159 = vld [vmem:[#allocation2 + $0x28] sm:$0xff]
    %v160 = vld [vmem:[#allocation2 + $0x30] sm:$0xff]
    %v161 = vld [vmem:[#allocation2 + $0x38] sm:$0xff]
    %v162 = vld [vmem:[#allocation2 + $0x40] sm:$0xff]
    %v163 = vld [vmem:[#allocation2 + $0x48] sm:$0xff]
    %v164 = vld [vmem:[#allocation2 + $0x50] sm:$0xff]
    %v165 = vld [vmem:[#allocation2 + $0x58] sm:$0xff]
    %v166 = vld [vmem:[#allocation2 + $0x60] sm:$0xff]
    %v167 = vld [vmem:[#allocation2 + $0x68] sm:$0xff]
    %v168 = vld [vmem:[#allocation2 + $0x70] sm:$0xff]
    %v169 = vld [vmem:[#allocation2 + $0x78] sm:$0xff]
    %v170 = vld [vmem:[#allocation2 + $0x80] sm:$0xff]
    %v171 = vld [vmem:[#allocation2 + $0x88] sm:$0xff]
    %v172 = vld [vmem:[#allocation2 + $0x90] sm:$0xff]
    %v173 = vld [vmem:[#allocation2 + $0x98] sm:$0xff]
    %v174 = vld [vmem:[#allocation2 + $0xa0] sm:$0xff]
    %v175 = vld [vmem:[#allocation2 + $0xa8] sm:$0xff]
    %v176 = vld [vmem:[#allocation2 + $0xb0] sm:$0xff]
    %v177 = vld [vmem:[#allocation2 + $0xb8] sm:$0xff]
    %v178 = vld [vmem:[#allocation2 + $0xc0] sm:$0xff]
    %v179 = vld [vmem:[#allocation2 + $0xc8] sm:$0xff]
    %v180 = vld [vmem:[#allocation2 + $0xd0] sm:$0xff]
    %v181 = vld [vmem:[#allocation2 + $0xd8] sm:$0xff]
    %v182 = vld [vmem:[#allocation2 + $0xe0] sm:$0xff]
    %v183 = vld [vmem:[#allocation2 + $0xe8] sm:$0xff]
    %v184 = vld [vmem:[#allocation2 + $0xf0] sm:$0xff]
    %v185 = vld [vmem:[#allocation2 + $0xf8] sm:$0xff]
    %v186 = vld [vmem:[%s4] sm:$0x3]
    %v188 = vlaneseq
    %v189 = vshrl.u32 %v188, 7
    %v190 = vsub.s32 0, %v189
    %v191 = vrot.slane %v186, %v190
    %v192 = vlaneseq
    %v193 = vshrl.u32 %v192, 7
    %v194 = vsub.s32 1, %v193
    %v195 = vrot.slane %v186, %v194
    %v230 = vunpack.c.l.b16 %v154
    %v231 = vunpack.c.h.b16 %v154
    %v232 = vunpack.c.l.b16 %v155
    %v233 = vunpack.c.h.b16 %v155
    %v234 = vunpack.c.l.b16 %v156
    %v235 = vunpack.c.h.b16 %v156
    %v236 = vunpack.c.l.b16 %v157
    %v237 = vunpack.c.h.b16 %v157
    %v238 = vunpack.c.l.b16 %v158
    %v239 = vunpack.c.h.b16 %v158
    %v240 = vunpack.c.l.b16 %v159
    %v241 = vunpack.c.h.b16 %v159
    %v242 = vunpack.c.l.b16 %v160
    %v243 = vunpack.c.h.b16 %v160
    %v244 = vunpack.c.l.b16 %v161
    %v245 = vunpack.c.h.b16 %v161
    %v246 = vunpack.c.l.b16 %v162
    %v247 = vunpack.c.h.b16 %v162
    %v248 = vunpack.c.l.b16 %v163
    %v249 = vunpack.c.h.b16 %v163
    %v250 = vunpack.c.l.b16 %v164
    %v251 = vunpack.c.h.b16 %v164
    %v252 = vunpack.c.l.b16 %v165
    %v253 = vunpack.c.h.b16 %v165
    %v254 = vunpack.c.l.b16 %v166
    %v255 = vunpack.c.h.b16 %v166
    %v256 = vunpack.c.l.b16 %v167
    %v257 = vunpack.c.h.b16 %v167
    %v258 = vunpack.c.l.b16 %v168
    %v259 = vunpack.c.h.b16 %v168
    %v260 = vunpack.c.l.b16 %v169
    %v261 = vunpack.c.h.b16 %v169
    %v262 = vunpack.c.l.b16 %v170
    %v263 = vunpack.c.h.b16 %v170
    %v264 = vunpack.c.l.b16 %v171
    %v265 = vunpack.c.h.b16 %v171
    %v266 = vunpack.c.l.b16 %v172
    %v267 = vunpack.c.h.b16 %v172
    %v268 = vunpack.c.l.b16 %v173
    %v269 = vunpack.c.h.b16 %v173
    %v270 = vunpack.c.l.b16 %v174
    %v271 = vunpack.c.h.b16 %v174
    %v272 = vunpack.c.l.b16 %v175
    %v273 = vunpack.c.h.b16 %v175
    %v274 = vunpack.c.l.b16 %v176
    %v275 = vunpack.c.h.b16 %v176
    %v276 = vunpack.c.l.b16 %v177
    %v277 = vunpack.c.h.b16 %v177
    %v278 = vunpack.c.l.b16 %v178
    %v279 = vunpack.c.h.b16 %v178
    %v280 = vunpack.c.l.b16 %v179
    %v281 = vunpack.c.h.b16 %v179
    %v282 = vunpack.c.l.b16 %v180
    %v283 = vunpack.c.h.b16 %v180
    %v284 = vunpack.c.l.b16 %v181
    %v285 = vunpack.c.h.b16 %v181
    %v286 = vunpack.c.l.b16 %v182
    %v287 = vunpack.c.h.b16 %v182
    %v288 = vunpack.c.l.b16 %v183
    %v289 = vunpack.c.h.b16 %v183
    %v290 = vunpack.c.l.b16 %v184
    %v291 = vunpack.c.h.b16 %v184
    %v292 = vunpack.c.l.b16 %v185
    %v293 = vunpack.c.h.b16 %v185
    %v294 = vpack.c.b16 %v232, %v230
    %v295 = vpack.c.b16 %v233, %v231
    %v296 = vpack.c.b16 %v236, %v234
    %v297 = vpack.c.b16 %v237, %v235
    %v298 = vpack.c.b16 %v240, %v238
    %v299 = vpack.c.b16 %v241, %v239
    %v300 = vpack.c.b16 %v244, %v242
    %v301 = vpack.c.b16 %v245, %v243
    %v302 = vpack.c.b16 %v248, %v246
    %v303 = vpack.c.b16 %v249, %v247
    %v304 = vpack.c.b16 %v252, %v250
    %v305 = vpack.c.b16 %v253, %v251
    %v306 = vpack.c.b16 %v256, %v254
    %v307 = vpack.c.b16 %v257, %v255
    %v308 = vpack.c.b16 %v260, %v258
    %v309 = vpack.c.b16 %v261, %v259
    %v310 = vpack.c.b16 %v264, %v262
    %v311 = vpack.c.b16 %v265, %v263
    %v312 = vpack.c.b16 %v268, %v266
    %v313 = vpack.c.b16 %v269, %v267
    %v314 = vpack.c.b16 %v272, %v270
    %v315 = vpack.c.b16 %v273, %v271
    %v316 = vpack.c.b16 %v276, %v274
    %v317 = vpack.c.b16 %v277, %v275
    %v318 = vpack.c.b16 %v280, %v278
    %v319 = vpack.c.b16 %v281, %v279
    %v320 = vpack.c.b16 %v284, %v282
    %v321 = vpack.c.b16 %v285, %v283
    %v322 = vpack.c.b16 %v288, %v286
    %v323 = vpack.c.b16 %v289, %v287
    %v324 = vpack.c.b16 %v292, %v290
    %v325 = vpack.c.b16 %v293, %v291
    %358 = vmatprep.subr.bf16.mxu0 %v309
    %359 = vmatpush1.bf16.msra.mxu0 %v308
    %360 = vmatprep.subr.bf16.mxu0 %v307
    %361 = vmatpush1.bf16.msra.mxu0 %v306
    %362 = vmatprep.subr.bf16.mxu0 %v305
    %363 = vmatpush1.bf16.msra.mxu0 %v304
    %364 = vmatprep.subr.bf16.mxu0 %v303
    %365 = vmatpush1.bf16.msra.mxu0 %v302
    %366 = vmatprep.subr.bf16.mxu0 %v301
    %367 = vmatpush1.bf16.msra.mxu0 %v300
    %368 = vmatprep.subr.bf16.mxu0 %v299
    %369 = vmatpush1.bf16.msra.mxu0 %v298
    %370 = vmatprep.subr.bf16.mxu0 %v297
    %371 = vmatpush1.bf16.msra.mxu0 %v296
    %372 = vmatprep.subr.bf16.mxu0 %v295
    %373 = vmatpush1.bf16.msra.mxu0 %v294
    %374 = vmatprep.subr.bf16.mxu0 %v325
    %375 = vmatpush2.bf16.msra.mxu0 %v324
    %376 = vmatprep.subr.bf16.mxu0 %v323
    %377 = vmatpush2.bf16.msra.mxu0 %v322
    %378 = vmatprep.subr.bf16.mxu0 %v321
    %379 = vmatpush2.bf16.msra.mxu0 %v320
    %380 = vmatprep.subr.bf16.mxu0 %v319
    %381 = vmatpush2.bf16.msra.mxu0 %v318
    %382 = vmatprep.subr.bf16.mxu0 %v317
    %383 = vmatpush2.bf16.msra.mxu0 %v316
    %384 = vmatprep.subr.bf16.mxu0 %v315
    %385 = vmatpush2.bf16.msra.mxu0 %v314
    %386 = vmatprep.subr.bf16.mxu0 %v313
    %387 = vmatpush2.bf16.msra.mxu0 %v312
    %388 = vmatprep.subr.bf16.mxu0 %v311
    %389 = vmatpush2.bf16.msra.mxu0 %v310
    %390 = vmatprep.mubr.bf16.mxu0 %v153
    %391 = vmatmul.mubr.bf16.gmra.mxu0 %v152
    %v392 = vpop.f32.mrf.mxu0
    %v393 = vadd.f32 %v191, %v392
    %v394 = vpop.f32.mrf.mxu0
    %v395 = vadd.f32 %v195, %v394
    %v396 = vpop.f32.mrf.mxu0
    %v397 = vadd.f32 %v191, %v396
    %v398 = vpop.f32.mrf.mxu0
    %v399 = vadd.f32 %v195, %v398
    %400 = vdwg.mxu0
    %v401 = vmax.f32 %v393, 0.0
    %v402 = vmax.f32 %v395, 0.0
    %v403 = vmax.f32 %v397, 0.0
    %v404 = vmax.f32 %v399, 0.0
    %v405 = vpack.c.bf16 %v403, %v401
    %v406 = vpack.c.bf16 %v404, %v402
    %v407 = vld [vmem:[#allocation5] sm:$0xf]
    %v408 = vld [vmem:[#allocation5 + $0x4] sm:$0xf]
    %v409 = vld [vmem:[#allocation5 + $0x8] sm:$0xf]
    %v410 = vld [vmem:[#allocation5 + $0xc] sm:$0xf]
    %v411 = vld [vmem:[#allocation5 + $0x10] sm:$0xf]
    %v412 = vld [vmem:[#allocation5 + $0x14] sm:$0xf]
    %v413 = vld [vmem:[#allocation5 + $0x18] sm:$0xf]
    %v414 = vld [vmem:[#allocation5 + $0x1c] sm:$0xf]
    %v415 = vld [vmem:[#allocation5 + $0x20] sm:$0xf]
    %v416 = vld [vmem:[#allocation5 + $0x24] sm:$0xf]
    %v417 = vld [vmem:[#allocation5 + $0x28] sm:$0xf]
    %v418 = vld [vmem:[#allocation5 + $0x2c] sm:$0xf]
    %v419 = vld [vmem:[#allocation5 + $0x30] sm:$0xf]
    %v420 = vld [vmem:[#allocation5 + $0x34] sm:$0xf]
    %v421 = vld [vmem:[#allocation5 + $0x38] sm:$0xf]
    %v422 = vld [vmem:[#allocation5 + $0x3c] sm:$0xf]
    %v423 = vld [vmem:[#allocation5 + $0x40] sm:$0xf]
    %v424 = vld [vmem:[#allocation5 + $0x44] sm:$0xf]
    %v425 = vld [vmem:[#allocation5 + $0x48] sm:$0xf]
    %v426 = vld [vmem:[#allocation5 + $0x4c] sm:$0xf]
    %v427 = vld [vmem:[#allocation5 + $0x50] sm:$0xf]
    %v428 = vld [vmem:[#allocation5 + $0x54] sm:$0xf]
    %v429 = vld [vmem:[#allocation5 + $0x58] sm:$0xf]
    %v430 = vld [vmem:[#allocation5 + $0x5c] sm:$0xf]
    %v431 = vld [vmem:[#allocation5 + $0x60] sm:$0xf]
    %v432 = vld [vmem:[#allocation5 + $0x64] sm:$0xf]
    %v433 = vld [vmem:[#allocation5 + $0x68] sm:$0xf]
    %v434 = vld [vmem:[#allocation5 + $0x6c] sm:$0xf]
    %v435 = vld [vmem:[#allocation5 + $0x70] sm:$0xf]
    %v436 = vld [vmem:[#allocation5 + $0x74] sm:$0xf]
    %v437 = vld [vmem:[#allocation5 + $0x78] sm:$0xf]
    %v438 = vld [vmem:[#allocation5 + $0x7c] sm:$0xf]
    %v439 = vld [vmem:[%s6] sm:$0x1]
    %v441 = vlaneseq
    %v442 = vshrl.u32 %v441, 7
    %v443 = vsub.s32 0, %v442
    %v444 = vrot.slane %v439, %v443
    %v478 = vunpack.c.l.b16 %v407
    %v479 = vunpack.c.l.b16 %v408
    %v480 = vunpack.c.l.b16 %v409
    %v481 = vunpack.c.l.b16 %v410
    %v482 = vunpack.c.l.b16 %v411
    %v483 = vunpack.c.l.b16 %v412
    %v484 = vunpack.c.l.b16 %v413
    %v485 = vunpack.c.l.b16 %v414
    %v486 = vunpack.c.l.b16 %v415
    %v487 = vunpack.c.l.b16 %v416
    %v488 = vunpack.c.l.b16 %v417
    %v489 = vunpack.c.l.b16 %v418
    %v490 = vunpack.c.l.b16 %v419
    %v491 = vunpack.c.l.b16 %v420
    %v492 = vunpack.c.l.b16 %v421
    %v493 = vunpack.c.l.b16 %v422
    %v494 = vunpack.c.l.b16 %v423
    %v495 = vunpack.c.l.b16 %v424
    %v496 = vunpack.c.l.b16 %v425
    %v497 = vunpack.c.l.b16 %v426
    %v498 = vunpack.c.l.b16 %v427
    %v499 = vunpack.c.l.b16 %v428
    %v500 = vunpack.c.l.b16 %v429
    %v501 = vunpack.c.l.b16 %v430
    %v502 = vunpack.c.l.b16 %v431
    %v503 = vunpack.c.l.b16 %v432
    %v504 = vunpack.c.l.b16 %v433
    %v505 = vunpack.c.l.b16 %v434
    %v506 = vunpack.c.l.b16 %v435
    %v507 = vunpack.c.l.b16 %v436
    %v508 = vunpack.c.l.b16 %v437
    %v509 = vunpack.c.l.b16 %v438
    %v510 = vpack.c.b16 %v479, %v478
    %v511 = vpack.c.b16 %v481, %v480
    %v512 = vpack.c.b16 %v483, %v482
    %v513 = vpack.c.b16 %v485, %v484
    %v514 = vpack.c.b16 %v487, %v486
    %v515 = vpack.c.b16 %v489, %v488
    %v516 = vpack.c.b16 %v491, %v490
    %v517 = vpack.c.b16 %v493, %v492
    %v518 = vpack.c.b16 %v495, %v494
    %v519 = vpack.c.b16 %v497, %v496
    %v520 = vpack.c.b16 %v499, %v498
    %v521 = vpack.c.b16 %v501, %v500
    %v522 = vpack.c.b16 %v503, %v502
    %v523 = vpack.c.b16 %v505, %v504
    %v524 = vpack.c.b16 %v507, %v506
    %v525 = vpack.c.b16 %v509, %v508
    %542 = vmatprep.subr.bf16.mxu0 0
    %543 = vmatpush1.bf16.msra.mxu0 %v517
    %544 = vmatprep.subr.bf16.mxu0 0
    %545 = vmatpush1.bf16.msra.mxu0 %v516
    %546 = vmatprep.subr.bf16.mxu0 0
    %547 = vmatpush1.bf16.msra.mxu0 %v515
    %548 = vmatprep.subr.bf16.mxu0 0
    %549 = vmatpush1.bf16.msra.mxu0 %v514
    %550 = vmatprep.subr.bf16.mxu0 0
    %551 = vmatpush1.bf16.msra.mxu0 %v513
    %552 = vmatprep.subr.bf16.mxu0 0
    %553 = vmatpush1.bf16.msra.mxu0 %v512
    %554 = vmatprep.subr.bf16.mxu0 0
    %555 = vmatpush1.bf16.msra.mxu0 %v511
    %556 = vmatprep.subr.bf16.mxu0 0
    %557 = vmatpush1.bf16.msra.mxu0 %v510
    %558 = vmatprep.subr.bf16.mxu0 0
    %559 = vmatpush2.bf16.msra.mxu0 %v525
    %560 = vmatprep.subr.bf16.mxu0 0
    %561 = vmatpush2.bf16.msra.mxu0 %v524
    %562 = vmatprep.subr.bf16.mxu0 0
    %563 = vmatpush2.bf16.msra.mxu0 %v523
    %564 = vmatprep.subr.bf16.mxu0 0
    %565 = vmatpush2.bf16.msra.mxu0 %v522
    %566 = vmatprep.subr.bf16.mxu0 0
    %567 = vmatpush2.bf16.msra.mxu0 %v521
    %568 = vmatprep.subr.bf16.mxu0 0
    %569 = vmatpush2.bf16.msra.mxu0 %v520
    %570 = vmatprep.subr.bf16.mxu0 0
    %571 = vmatpush2.bf16.msra.mxu0 %v519
    %572 = vmatprep.subr.bf16.mxu0 0
    %573 = vmatpush2.bf16.msra.mxu0 %v518
    %574 = vmatprep.mubr.bf16.mxu0 %v406
    %575 = vmatmul.mubr.bf16.gmra.mxu0 %v405
    %v576 = vpop.f32.mrf.mxu0
    %v577 = vadd.f32 %v444, %v576
    %v578 = vpop.f32.mrf.mxu0
    %v579 = vpop.f32.mrf.mxu0
    %v580 = vadd.f32 %v444, %v579
    %v581 = vpop.f32.mrf.mxu0
    %582 = vdwg.mxu0
    %v583 = vmax.f32 %v577, 0.0
    %v584 = vmax.f32 %v580, 0.0
    %v585 = vpack.c.bf16 %v584, %v583
    %v586 = vld [vmem:[%s7] sm:$0xf]
    %v587 = vld [vmem:[%s7 + $0x4] sm:$0xf]
    %v588 = vld [vmem:[%s7 + $0x8] sm:$0xf]
    %v589 = vld [vmem:[%s7 + $0xc] sm:$0xf]
    %v590 = vld [vmem:[%s7 + $0x10] sm:$0xf]
    %v591 = vld [vmem:[%s7 + $0x14] sm:$0xf]
    %v592 = vld [vmem:[%s7 + $0x18] sm:$0xf]
    %v593 = vld [vmem:[%s7 + $0x1c] sm:$0xf]
    %v594 = vld [vmem:[%s7 + $0x20] sm:$0xf]
    %v595 = vld [vmem:[%s7 + $0x24] sm:$0xf]
    %v596 = vld [vmem:[%s7 + $0x28] sm:$0xf]
    %v597 = vld [vmem:[%s7 + $0x2c] sm:$0xf]
    %v598 = vld [vmem:[%s7 + $0x30] sm:$0xf]
    %v599 = vld [vmem:[%s7 + $0x34] sm:$0xf]
    %v600 = vld [vmem:[%s7 + $0x38] sm:$0xf]
    %v601 = vld [vmem:[%s7 + $0x3c] sm:$0xf]
    %v602 = vld [vmem:[%s8] sm:$0x1]
    %v604 = vlaneseq
    %v605 = vshrl.u32 %v604, 7
    %v606 = vsub.s32 0, %v605
    %v607 = vrot.slane %v602, %v606
    %v625 = vunpack.c.l.b16 %v586
    %v626 = vunpack.c.l.b16 %v587
    %v627 = vunpack.c.l.b16 %v588
    %v628 = vunpack.c.l.b16 %v589
    %v629 = vunpack.c.l.b16 %v590
    %v630 = vunpack.c.l.b16 %v591
    %v631 = vunpack.c.l.b16 %v592
    %v632 = vunpack.c.l.b16 %v593
    %v633 = vunpack.c.l.b16 %v594
    %v634 = vunpack.c.l.b16 %v595
    %v635 = vunpack.c.l.b16 %v596
    %v636 = vunpack.c.l.b16 %v597
    %v637 = vunpack.c.l.b16 %v598
    %v638 = vunpack.c.l.b16 %v599
    %v639 = vunpack.c.l.b16 %v600
    %v640 = vunpack.c.l.b16 %v601
    %v641 = vpack.c.b16 %v626, %v625
    %v642 = vpack.c.b16 %v628, %v627
    %v643 = vpack.c.b16 %v630, %v629
    %v644 = vpack.c.b16 %v632, %v631
    %v645 = vpack.c.b16 %v634, %v633
    %v646 = vpack.c.b16 %v636, %v635
    %v647 = vpack.c.b16 %v638, %v637
    %v648 = vpack.c.b16 %v640, %v639
    %657 = vmatprep.subr.bf16.mxu0 0
    %658 = vmatpush1.bf16.msra.mxu0 %v648
    %659 = vmatprep.subr.bf16.mxu0 0
    %660 = vmatpush1.bf16.msra.mxu0 %v647
    %661 = vmatprep.subr.bf16.mxu0 0
    %662 = vmatpush1.bf16.msra.mxu0 %v646
    %663 = vmatprep.subr.bf16.mxu0 0
    %664 = vmatpush1.bf16.msra.mxu0 %v645
    %665 = vmatprep.subr.bf16.mxu0 0
    %666 = vmatpush1.bf16.msra.mxu0 %v644
    %667 = vmatprep.subr.bf16.mxu0 0
    %668 = vmatpush1.bf16.msra.mxu0 %v643
    %669 = vmatprep.subr.bf16.mxu0 0
    %670 = vmatpush1.bf16.msra.mxu0 %v642
    %671 = vmatprep.subr.bf16.mxu0 0
    %672 = vmatpush1.bf16.msra.mxu0 %v641
    %673 = vmatprep.subr.bf16.mxu0 0
    %674 = vmatpush2.bf16.msra.mxu0 0
    %675 = vmatprep.subr.bf16.mxu0 0
    %676 = vmatpush2.bf16.msra.mxu0 0
    %677 = vmatprep.subr.bf16.mxu0 0
    %678 = vmatpush2.bf16.msra.mxu0 0
    %679 = vmatprep.subr.bf16.mxu0 0
    %680 = vmatpush2.bf16.msra.mxu0 0
    %681 = vmatprep.subr.bf16.mxu0 0
    %682 = vmatpush2.bf16.msra.mxu0 0
    %683 = vmatprep.subr.bf16.mxu0 0
    %684 = vmatpush2.bf16.msra.mxu0 0
    %685 = vmatprep.subr.bf16.mxu0 0
    %686 = vmatpush2.bf16.msra.mxu0 0
    %687 = vmatprep.subr.bf16.mxu0 0
    %688 = vmatpush2.bf16.msra.mxu0 0
    %689 = vmatprep.mubr.bf16.mxu0 0
    %690 = vmatmul.mubr.bf16.gmra.mxu0 %v585
    %v691 = vpop.f32.mrf.mxu0
    %v692 = vadd.f32 %v607, %v691
    %v693 = vpop.f32.mrf.mxu0
    %v694 = vpop.f32.mrf.mxu0
    %v695 = vadd.f32 %v607, %v694
    %v696 = vpop.f32.mrf.mxu0
    %697 = vdwg.mxu0
    %vm698 = vcmask 80896
    %699 = vst.msk [vmem:[#allocation7] sm:$0xff] %vm698, %v692
    %700 = vst.msk [vmem:[#allocation7 + $0x8] sm:$0xff] %vm698, %v695
    // Predicated region
    $region46: #{tpu_custom_call.1} parent=1 // pred_check
      _
    $region47: #{tpu_custom_call.1} parent=1 // pred_check_branch
      %702 = sbr.rel (0) target = $region49
    $region48: #{tpu_custom_call.1} parent=1 // pred_region
      %s704 = ssub.s32 256, 256
      %705 = vsyncadd [#allocation4], %s704
      %s706 = sshll.u32 [#allocation7], 4
      %s707 = int_to_ptr.vmem [resolvable:$true] %s706
      %712 = dma.vmem_to_hbm [thread:$0]  %s707, 256, %s9, [#allocation4], 128, 128, 8
    $region49: #{tpu_custom_call.1} parent=1 // pred_fallthru
      _
    // Predicated region
    $region50: #{tpu_custom_call.1} parent=1 // pred_check
      _
    $region51: #{tpu_custom_call.1} parent=1 // pred_check_branch
      %714 = sbr.rel (0) target = $region53
    $region52: #{tpu_custom_call.1} parent=1 // pred_region
      %715 = dma.done [#allocation4], 256
    $region53: #{tpu_custom_call.1} parent=1 // pred_fallthru
      _
    %716 = vsyncpa [#allocation3], 1
    %717 = vsyncpa [#allocation6], 1
    %718 = vsyncpa [#allocation4], 1

</llo_original>
